<compile_context>
chip_gen: v7x
topology: tpu7x:2x2x1
jax: 0.10.0
libtpu: 0.0.40
codegen_flags: <defaults>
</compile_context>

<pallas_src>
import jax
import jax.numpy as jnp
from jax import lax
from jax.experimental import pallas as pl
from jax.experimental.pallas import tpu as pltpu


def _make_mlp_kernel(n_chunks, ck):
    """Kernel factory: n_chunks * ck == bm (batch tile), both static ints."""

    def mlp_kernel(x_ref, w1_ref, b1_ref, w2_ref, b2_ref, w3_ref, b3_ref, o_ref):
        # Weights (bf16) and biases (f32) are tiny; load once per grid step.
        w1 = w1_ref[...]            # [64, 8]  bf16
        w2 = w2_ref[...]            # [64, 64] bf16
        w3 = w3_ref[...]            # [1, 64]  bf16
        b1 = b1_ref[...]            # [64, 1]  f32
        b2 = b2_ref[...]            # [64, 1]  f32
        b3 = b3_ref[...]            # [1, 1]   f32

        # Inner loop over lane-column chunks so h1/h2 stay in vregs (no VMEM
        # spill traffic); chunk=256 keeps h1+h2 at ~32 vregs in f32.
        @pl.loop(0, n_chunks)
        def _(c):
            col = pl.multiple_of(c * ck, ck)

            # x chunk: [ck, 8] (batch on sublanes); cast to bf16 for the MXU.
            xc = x_ref[pl.ds(col, ck), :].astype(jnp.bfloat16)

            # Layer 1: contract the feature axis of both operands
            # (w1[64,8] . xc[ck,8]^T) -> [64, ck]: batch moves onto lanes
            # with no explicit transpose / no wrapper-side x.T.
            h1 = lax.dot_general(
                w1, xc, (((1,), (1,)), ((), ())),
                preferred_element_type=jnp.float32)
            h1 = jnp.maximum(h1 + b1, 0.0)                       # [64, ck] f32

            # Layer 2: [64,64] @ [64,ck] -> [64, ck]
            h2 = jnp.dot(w2, h1.astype(jnp.bfloat16),
                         preferred_element_type=jnp.float32)
            h2 = jnp.maximum(h2 + b2, 0.0)                       # [64, ck] f32

            # Layer 3: [1,64] @ [64,ck] -> [1, ck]
            h3 = jnp.dot(w3, h2.astype(jnp.bfloat16),
                         preferred_element_type=jnp.float32)
            o_ref[:, pl.ds(col, ck)] = jnp.maximum(h3 + b3, 0.0).astype(o_ref.dtype)

    return mlp_kernel


def mlp_forward(x, params, *, block_m=4096, chunk=256):
    """x: [B, 8] float32 -> [B, 1] float32.

    params are PyTorch-native layout: W[out, in], b[out, 1] (float32).
    block_m: target batch tile (rows of x / lanes of the activations); the
    wrapper balances it to a 128-multiple that exactly divides the padded
    batch and keeps >= 2 grid steps whenever B >= 256 (megacore on v7x).
    chunk: inner lane-chunk size (256 keeps h1+h2 vreg-resident).
    """
    w1, b1, w2, b2, w3, b3 = params
    B, D_in = x.shape

    # Cast weights to bf16 once (wrapper-side, a few KB); biases stay f32.
    w1b = w1.astype(jnp.bfloat16)
    w2b = w2.astype(jnp.bfloat16)
    w3b = w3.astype(jnp.bfloat16)
    b1f = b1.astype(jnp.float32)
    b2f = b2.astype(jnp.float32)
    b3f = b3.astype(jnp.float32)

    # --- Tile-size / grid selection -----------------------------------------
    g = pl.cdiv(B, 128)                       # 128-row lane groups needed
    # Enough steps to cap the tile at block_m, and >=2 steps when possible so
    # dimension_semantics=("parallel",) can shard across both TCs on v7x.
    n = max(pl.cdiv(g * 128, block_m), 2 if g >= 2 else 1)
    bm = pl.cdiv(g, n) * 128                  # balanced, 128-aligned tile
    n = pl.cdiv(g * 128, bm)                  # rounding may drop a step
    B_pad = n * bm                            # pad at most ~(n-1)*128 rows
    if B_pad != B:
        x = jnp.pad(x, ((0, B_pad - B), (0, 0)))   # padded rows sliced off below

    ck = chunk if (bm % chunk == 0) else 128  # bm is always a multiple of 128
    n_chunks = bm // ck

    rep = lambda i: (0, 0)   # weights/biases: same block every grid step

    out = pl.pallas_call(
        _make_mlp_kernel(n_chunks, ck),
        out_shape=jax.ShapeDtypeStruct((1, B_pad), jnp.float32),
        grid_spec=pltpu.PrefetchScalarGridSpec(
            num_scalar_prefetch=0,
            grid=(n,),
            in_specs=[
                pl.BlockSpec((bm, D_in), lambda i: (i, 0)),   # x tile [bm, 8]
                pl.BlockSpec(w1b.shape, rep),                 # W1 [64, 8]  bf16
                pl.BlockSpec(b1f.shape, rep),                 # b1 [64, 1]  f32
                pl.BlockSpec(w2b.shape, rep),                 # W2 [64, 64] bf16
                pl.BlockSpec(b2f.shape, rep),                 # b2 [64, 1]  f32
                pl.BlockSpec(w3b.shape, rep),                 # W3 [1, 64]  bf16
                pl.BlockSpec(b3f.shape, rep),                 # b3 [1, 1]   f32
            ],
            out_specs=pl.BlockSpec((1, bm), lambda i: (0, i)),  # lane-dense out
        ),
        compiler_params=pltpu.CompilerParams(
            # Batch axis is embarrassingly parallel -> megacore sharding on v7x.
            dimension_semantics=("parallel",),
            # VMEM note: per-step footprint is ~(32+4)*bm*2 bytes (~0.3 MiB at
            # bm=4096) since intermediates are chunked into vregs, far below
            # the scoped defaults on all of v5e/v6e/v7x -> no limit override.
        ),
    )(x, w1b, b1f, w2b, b2f, w3b, b3f)

    # [1, B_pad] -> [B, 1]
    return out[0, :B][:, None]


def init_params(key):
    """Deterministic init matching PyTorch nn.Linear default
    (uniform +-1/sqrt(fan_in)).  Layout: W [out, in], b [out, 1], float32."""
    dims = [(8, 64), (64, 64), (64, 1)]
    params = []
    for fan_in, fan_out in dims:
        key, kw, kb = jax.random.split(key, 3)
        bound = 1.0 / jnp.sqrt(fan_in)
        w = jax.random.uniform(kw, (fan_out, fan_in), jnp.float32, -bound, bound)
        b = jax.random.uniform(kb, (fan_out, 1), jnp.float32, -bound, bound)
        params += [w, b]
    return tuple(params)


def mlp_reference(x, params):
    """Full-f32 reference (matches the PyTorch module semantics)."""
    w1, b1, w2, b2, w3, b3 = params
    h = jnp.maximum(x @ w1.T + b1.T, 0.0)
    h = jnp.maximum(h @ w2.T + b2.T, 0.0)
    return jnp.maximum(h @ w3.T + b3.T, 0.0)


def mlp_reference_bf16(x, params):
    """Reference mirroring the kernel's bf16-operand / f32-accumulate matmuls."""
    w1, b1, w2, b2, w3, b3 = params
    bf = jnp.bfloat16

    def lin(h, w, b):
        y = jnp.dot(h.astype(bf), w.astype(bf).T,
                    preferred_element_type=jnp.float32)
        return jnp.maximum(y + b.T, 0.0)

    h = lin(x, w1, b1)
    h = lin(h, w2, b2)
    return lin(h, w3, b3)


if __name__ == "__main__":
    key = jax.random.PRNGKey(0)
    key, kx1, kx2 = jax.random.split(key, 3)
    params = init_params(key)

    # Case 1: small batch, padded to one 128-lane block (grid = 1, chunk = 128).
    x_small = jax.random.normal(kx1, (8, 8), jnp.float32)
    out_small = jax.block_until_ready(mlp_forward(x_small, params))
    assert out_small.shape == (8, 1)
    # bf16 MXU operands -> relaxed tolerance vs. the f32 reference ...
    assert jnp.allclose(out_small, mlp_reference(x_small, params),
                        atol=5e-2, rtol=5e-2), "mismatch vs f32 ref (small)"
    # ... and a tight check vs. a bf16-matched reference.
    assert jnp.allclose(out_small, mlp_reference_bf16(x_small, params),
                        atol=2e-3, rtol=2e-3), "mismatch vs bf16 ref (small)"

    # Case 2: ragged batch -> 128-pad + balanced 2-step grid (256-row tiles),
    # exercising the pipelined / megacore-shardable path.
    x_big = jax.random.normal(kx2, (300, 8), jnp.float32)
    out_big = jax.block_until_ready(mlp_forward(x_big, params))
    assert out_big.shape == (300, 1)
    assert jnp.allclose(out_big, mlp_reference(x_big, params),
                        atol=5e-2, rtol=5e-2), "mismatch vs f32 ref (big)"
    assert jnp.allclose(out_big, mlp_reference_bf16(x_big, params),
                        atol=2e-3, rtol=2e-3), "mismatch vs bf16 ref (big)"

    print("KERNEL_OK")
</pallas_src>

<mosaic_0001>
module attributes {stable_mosaic.version = 11 : i64} {
  func.func @mlp_kernel(%arg0: i32, %arg1: memref<128x8xf32, #tpu.memory_space<vmem>>, %arg2: memref<64x8xbf16, #tpu.memory_space<vmem>>, %arg3: memref<64x1xf32, #tpu.memory_space<vmem>>, %arg4: memref<64x64xbf16, #tpu.memory_space<vmem>>, %arg5: memref<64x1xf32, #tpu.memory_space<vmem>>, %arg6: memref<1x64xbf16, #tpu.memory_space<vmem>>, %arg7: memref<1x1xf32, #tpu.memory_space<vmem>>, %arg8: memref<1x128xf32, #tpu.memory_space<vmem>>) attributes {dimension_semantics = [#tpu.dimension_semantics<parallel>], iteration_bounds = array<i64: 1>, scalar_prefetch = 0 : i64, scratch_operands = 0 : i64, tpu.core_type = #tpu.core_type<tc>, window_params = [{transform_indices = @transform_0, window_bounds = array<i64: 128, 8>}, {pipeline_mode = #tpu.pipeline_mode<synchronous>, transform_indices = @transform_1, window_bounds = array<i64: 64, 8>}, {pipeline_mode = #tpu.pipeline_mode<synchronous>, transform_indices = @transform_2, window_bounds = array<i64: 64, 1>}, {pipeline_mode = #tpu.pipeline_mode<synchronous>, transform_indices = @transform_3, window_bounds = array<i64: 64, 64>}, {pipeline_mode = #tpu.pipeline_mode<synchronous>, transform_indices = @transform_4, window_bounds = array<i64: 64, 1>}, {pipeline_mode = #tpu.pipeline_mode<synchronous>, transform_indices = @transform_5, window_bounds = array<i64: 1, 64>}, {pipeline_mode = #tpu.pipeline_mode<synchronous>, transform_indices = @transform_6, window_bounds = array<i64: 1, 1>}, {transform_indices = @transform_7, window_bounds = array<i64: 1, 128>}]} {
    %c0 = arith.constant 0 : index
    %c0_0 = arith.constant 0 : index
    %0 = vector.load %arg2[%c0, %c0_0] : memref<64x8xbf16, #tpu.memory_space<vmem>>, vector<64x8xbf16>
    %c0_1 = arith.constant 0 : index
    %c0_2 = arith.constant 0 : index
    %1 = vector.load %arg4[%c0_1, %c0_2] : memref<64x64xbf16, #tpu.memory_space<vmem>>, vector<64x64xbf16>
    %c0_3 = arith.constant 0 : index
    %c0_4 = arith.constant 0 : index
    %2 = vector.load %arg6[%c0_3, %c0_4] : memref<1x64xbf16, #tpu.memory_space<vmem>>, vector<1x64xbf16>
    %c0_5 = arith.constant 0 : index
    %c0_6 = arith.constant 0 : index
    %3 = vector.load %arg3[%c0_5, %c0_6] : memref<64x1xf32, #tpu.memory_space<vmem>>, vector<64x1xf32>
    %c0_7 = arith.constant 0 : index
    %c0_8 = arith.constant 0 : index
    %4 = vector.load %arg5[%c0_7, %c0_8] : memref<64x1xf32, #tpu.memory_space<vmem>>, vector<64x1xf32>
    %c0_9 = arith.constant 0 : index
    %c0_10 = arith.constant 0 : index
    %5 = vector.load %arg7[%c0_9, %c0_10] : memref<1x1xf32, #tpu.memory_space<vmem>>, vector<1x1xf32>
    %c0_i32 = arith.constant 0 : i32
    %c1_i32 = arith.constant 1 : i32
    %6 = arith.muli %c0_i32, %c1_i32 : i32
    %c0_i32_11 = arith.constant 0 : i32
    %7 = arith.addi %c0_i32_11, %6 : i32
    %c128_i32 = arith.constant 128 : i32
    %8 = arith.muli %7, %c128_i32 : i32
    %9 = tpu.assume_multiple %8, 128 : i32
    %10 = arith.index_cast %9 : i32 to index
    %c0_12 = arith.constant 0 : index
    %11 = vector.load %arg1[%10, %c0_12] : memref<128x8xf32, #tpu.memory_space<vmem>>, vector<128x8xf32>
    %12 = arith.truncf %11 : vector<128x8xf32> to vector<128x8xbf16>
    %cst = arith.constant dense<0.000000e+00> : vector<64x128xf32>
    %13 = tpu.matmul %0, %12, %cst {dimension_numbers = #tpu.dot_dimension_numbers<[1], [1], [0], [0], [0, 0, 1, 0], [], []>} : vector<64x8xbf16>, vector<128x8xbf16>, vector<64x128xf32> -> vector<64x128xf32>
    %14 = vector.broadcast %3 : vector<64x1xf32> to vector<64x128xf32>
    %15 = arith.addf %13, %14 : vector<64x128xf32>
    %cst_13 = arith.constant 0.000000e+00 : f32
    %16 = vector.broadcast %cst_13 : f32 to vector<64x128xf32>
    %17 = arith.maximumf %15, %16 : vector<64x128xf32>
    %18 = arith.truncf %17 : vector<64x128xf32> to vector<64x128xbf16>
    %cst_14 = arith.constant dense<0.000000e+00> : vector<64x128xf32>
    %19 = tpu.matmul %1, %18, %cst_14 {dimension_numbers = #tpu.dot_dimension_numbers<[1], [0], [0], [1], [0, 0, 1, 1], [], []>} : vector<64x64xbf16>, vector<64x128xbf16>, vector<64x128xf32> -> vector<64x128xf32>
    %20 = vector.broadcast %4 : vector<64x1xf32> to vector<64x128xf32>
    %21 = arith.addf %19, %20 : vector<64x128xf32>
    %cst_15 = arith.constant 0.000000e+00 : f32
    %22 = vector.broadcast %cst_15 : f32 to vector<64x128xf32>
    %23 = arith.maximumf %21, %22 : vector<64x128xf32>
    %24 = arith.truncf %23 : vector<64x128xf32> to vector<64x128xbf16>
    %cst_16 = arith.constant dense<0.000000e+00> : vector<1x128xf32>
    %25 = tpu.matmul %2, %24, %cst_16 {dimension_numbers = #tpu.dot_dimension_numbers<[1], [0], [0], [1], [0, 0, 1, 1], [], []>} : vector<1x64xbf16>, vector<64x128xbf16>, vector<1x128xf32> -> vector<1x128xf32>
    %26 = vector.broadcast %5 : vector<1x1xf32> to vector<1x128xf32>
    %27 = arith.addf %25, %26 : vector<1x128xf32>
    %cst_17 = arith.constant 0.000000e+00 : f32
    %28 = vector.broadcast %cst_17 : f32 to vector<1x128xf32>
    %29 = arith.maximumf %27, %28 : vector<1x128xf32>
    %c0_18 = arith.constant 0 : index
    %30 = arith.index_cast %9 : i32 to index
    %31 = vector.load %arg8[%c0_18, %30] : memref<1x128xf32, #tpu.memory_space<vmem>>, vector<1x128xf32>
    tpu.vector_store %arg8[%c0_18, %30], %29 {strides = array<i32>} : memref<1x128xf32, #tpu.memory_space<vmem>>, vector<1x128xf32>,
    %c1_i32_19 = arith.constant 1 : i32
    return
  }
  func.func @transform_0(%arg0: i32) -> (i32, i32) {
    %c0_i32 = arith.constant 0 : i32
    %c0_i32_0 = arith.constant 0 : i32
    return %arg0, %c0_i32 : i32, i32
  }
  func.func @transform_1(%arg0: i32) -> (i32, i32) {
    %c0_i32 = arith.constant 0 : i32
    %c0_i32_0 = arith.constant 0 : i32
    %c0_i32_1 = arith.constant 0 : i32
    return %c0_i32, %c0_i32_0 : i32, i32
  }
  func.func @transform_2(%arg0: i32) -> (i32, i32) {
    %c0_i32 = arith.constant 0 : i32
    %c0_i32_0 = arith.constant 0 : i32
    %c0_i32_1 = arith.constant 0 : i32
    return %c0_i32, %c0_i32_0 : i32, i32
  }
  func.func @transform_3(%arg0: i32) -> (i32, i32) {
    %c0_i32 = arith.constant 0 : i32
    %c0_i32_0 = arith.constant 0 : i32
    %c0_i32_1 = arith.constant 0 : i32
    return %c0_i32, %c0_i32_0 : i32, i32
  }
  func.func @transform_4(%arg0: i32) -> (i32, i32) {
    %c0_i32 = arith.constant 0 : i32
    %c0_i32_0 = arith.constant 0 : i32
    %c0_i32_1 = arith.constant 0 : i32
    return %c0_i32, %c0_i32_0 : i32, i32
  }
  func.func @transform_5(%arg0: i32) -> (i32, i32) {
    %c0_i32 = arith.constant 0 : i32
    %c0_i32_0 = arith.constant 0 : i32
    %c0_i32_1 = arith.constant 0 : i32
    return %c0_i32, %c0_i32_0 : i32, i32
  }
  func.func @transform_6(%arg0: i32) -> (i32, i32) {
    %c0_i32 = arith.constant 0 : i32
    %c0_i32_0 = arith.constant 0 : i32
    %c0_i32_1 = arith.constant 0 : i32
    return %c0_i32, %c0_i32_0 : i32, i32
  }
  func.func @transform_7(%arg0: i32) -> (i32, i32) {
    %c0_i32 = arith.constant 0 : i32
    %c0_i32_0 = arith.constant 0 : i32
    return %c0_i32, %arg0 : i32, i32
  }
}

</mosaic_0001>

<llo_original>
// kernel: tpu_custom_call.1
$region0: #{tpu_custom_call.1}
  #allocation0 [shape = 'u32[]', space=smem, size = 0x4, offset = 0x4, fixed_abs, tag = 'smem constant byte address 0x4 - core index']
  #allocation1 [shape = 'u32[144,128]{1,0:T(1,128)}', space=vmem, size = 0x12000, scoped, tag = 'internal scratch']
  #allocation2 [shape = 'f32[1,1]{1,0:T(1,128)S(1)}', space=vmem, size = 0x200, scoped, tag = 'scoped memory for tpu_custom_call.1']
  %s0 = inlined_call_operand.vmem [shape: f32[128,8], index: 0, kind: input, shape index: {}]
  %s1 = inlined_call_operand.vmem [shape: bf16[64,8], index: 1, kind: input, shape index: {}]
  %s2 = inlined_call_operand.vmem [shape: f32[64,1], index: 2, kind: input, shape index: {}]
  %s3 = inlined_call_operand.vmem [shape: bf16[64,64], index: 3, kind: input, shape index: {}]
  %s4 = inlined_call_operand.vmem [shape: f32[64,1], index: 4, kind: input, shape index: {}]
  %s5 = inlined_call_operand.vmem [shape: bf16[1,64], index: 5, kind: input, shape index: {}]
  %s6 = inlined_call_operand.<no memory space> [shape: f32[1,1], index: 6, kind: input, shape index: {}]
  %s7 = inlined_call_operand.hbm [shape: f32[1,128], index: 7, kind: output, shape index: {}]
  %s8 = sld [smem:[#allocation0]]
  $region38: #{tpu_custom_call.1} parent=0
    _
  %s10 = ssub.s32 1, %s8
  %s11 = scalar_select 0, %s10, %s8
  %v12 = vstv %s6
  %13 = vst [vmem:[#allocation2] sm:$0x1] %v12
  $region1: #{tpu_custom_call.1} parent=0
    #allocation3 [shape = 'u8[512]{0}', space=vmem, size = 0x400, scoped, tag = 'output window, operand 0, single buffered']
    #allocation4 [shape = 's32[1]{0}', space=sflag, size = 0x4, scoped, tag = 'scoped memory for tpu_custom_call.1']
    %14 = vsyncpa [#allocation4], 0
    // Predicated region
    $region2: #{tpu_custom_call.1} parent=1 // pred_check
      _
    $region3: #{tpu_custom_call.1} parent=1 // pred_check_branch
      %16 = sbr.rel (0) target = $region5
    $region4: #{tpu_custom_call.1} parent=1 // pred_region
      _
    $region5: #{tpu_custom_call.1} parent=1 // pred_fallthru
      _
    // Predicated region
    $region6: #{tpu_custom_call.1} parent=1 // pred_check
      _
    $region7: #{tpu_custom_call.1} parent=1 // pred_check_branch
      %18 = sbr.rel (0) target = $region9
    $region8: #{tpu_custom_call.1} parent=1 // pred_region
      _
    $region9: #{tpu_custom_call.1} parent=1 // pred_fallthru
      _
    // Predicated region
    $region10: #{tpu_custom_call.1} parent=1 // pred_check
      _
    $region11: #{tpu_custom_call.1} parent=1 // pred_check_branch
      %20 = sbr.rel (0) target = $region13
    $region12: #{tpu_custom_call.1} parent=1 // pred_region
      _
    $region13: #{tpu_custom_call.1} parent=1 // pred_fallthru
      _
    // Predicated region
    $region14: #{tpu_custom_call.1} parent=1 // pred_check
      _
    $region15: #{tpu_custom_call.1} parent=1 // pred_check_branch
      %22 = sbr.rel (0) target = $region17
    $region16: #{tpu_custom_call.1} parent=1 // pred_region
      _
    $region17: #{tpu_custom_call.1} parent=1 // pred_fallthru
      _
    // Predicated region
    $region18: #{tpu_custom_call.1} parent=1 // pred_check
      _
    $region19: #{tpu_custom_call.1} parent=1 // pred_check_branch
      %24 = sbr.rel (0) target = $region21
    $region20: #{tpu_custom_call.1} parent=1 // pred_region
      _
    $region21: #{tpu_custom_call.1} parent=1 // pred_fallthru
      _
    // Predicated region
    $region22: #{tpu_custom_call.1} parent=1 // pred_check
      _
    $region23: #{tpu_custom_call.1} parent=1 // pred_check_branch
      %26 = sbr.rel (0) target = $region25
    $region24: #{tpu_custom_call.1} parent=1 // pred_region
      _
    $region25: #{tpu_custom_call.1} parent=1 // pred_fallthru
      _
    // Predicated region
    $region26: #{tpu_custom_call.1} parent=1 // pred_check
      _
    $region27: #{tpu_custom_call.1} parent=1 // pred_check_branch
      %28 = sbr.rel (0) target = $region29
    $region28: #{tpu_custom_call.1} parent=1 // pred_region
      _
    $region29: #{tpu_custom_call.1} parent=1 // pred_fallthru
      _
    %v30 = vld [vmem:[%s1] sm:$0xf]
    %v31 = vld [vmem:[%s1 + $0x4] sm:$0xf]
    %v32 = vld [vmem:[%s1 + $0x8] sm:$0xf]
    %v33 = vld [vmem:[%s1 + $0xc] sm:$0xf]
    %v34 = vld [vmem:[%s1 + $0x10] sm:$0xf]
    %v35 = vld [vmem:[%s1 + $0x14] sm:$0xf]
    %v36 = vld [vmem:[%s1 + $0x18] sm:$0xf]
    %v37 = vld [vmem:[%s1 + $0x1c] sm:$0xf]
    %v38 = vld [vmem:[%s3] sm:$0xf]
    %v39 = vld [vmem:[%s3 + $0x4] sm:$0xf]
    %v40 = vld [vmem:[%s3 + $0x8] sm:$0xf]
    %v41 = vld [vmem:[%s3 + $0xc] sm:$0xf]
    %v42 = vld [vmem:[%s3 + $0x10] sm:$0xf]
    %v43 = vld [vmem:[%s3 + $0x14] sm:$0xf]
    %v44 = vld [vmem:[%s3 + $0x18] sm:$0xf]
    %v45 = vld [vmem:[%s3 + $0x1c] sm:$0xf]
    %v46 = vld [vmem:[%s5] sm:$0x1]
    %v47 = vld [vmem:[%s2] sm:$0xff]
    %v48 = vld [vmem:[%s2 + $0x8] sm:$0xff]
    %v49 = vld [vmem:[%s2 + $0x10] sm:$0xff]
    %v50 = vld [vmem:[%s2 + $0x18] sm:$0xff]
    %v51 = vld [vmem:[%s2 + $0x20] sm:$0xff]
    %v52 = vld [vmem:[%s2 + $0x28] sm:$0xff]
    %v53 = vld [vmem:[%s2 + $0x30] sm:$0xff]
    %v54 = vld [vmem:[%s2 + $0x38] sm:$0xff]
    %v55 = vld [vmem:[%s4] sm:$0xff]
    %v56 = vld [vmem:[%s4 + $0x8] sm:$0xff]
    %v57 = vld [vmem:[%s4 + $0x10] sm:$0xff]
    %v58 = vld [vmem:[%s4 + $0x18] sm:$0xff]
    %v59 = vld [vmem:[%s4 + $0x20] sm:$0xff]
    %v60 = vld [vmem:[%s4 + $0x28] sm:$0xff]
    %v61 = vld [vmem:[%s4 + $0x30] sm:$0xff]
    %v62 = vld [vmem:[%s4 + $0x38] sm:$0xff]
    %v63 = vld [vmem:[#allocation2] sm:$0x1]
    %v64 = vld [vmem:[%s0] sm:$0xff]
    %v65 = vld [vmem:[%s0 + $0x8] sm:$0xff]
    %v66 = vld [vmem:[%s0 + $0x10] sm:$0xff]
    %v67 = vld [vmem:[%s0 + $0x18] sm:$0xff]
    %v68 = vld [vmem:[%s0 + $0x20] sm:$0xff]
    %v69 = vld [vmem:[%s0 + $0x28] sm:$0xff]
    %v70 = vld [vmem:[%s0 + $0x30] sm:$0xff]
    %v71 = vld [vmem:[%s0 + $0x38] sm:$0xff]
    %v72 = vld [vmem:[%s0 + $0x40] sm:$0xff]
    %v73 = vld [vmem:[%s0 + $0x48] sm:$0xff]
    %v74 = vld [vmem:[%s0 + $0x50] sm:$0xff]
    %v75 = vld [vmem:[%s0 + $0x58] sm:$0xff]
    %v76 = vld [vmem:[%s0 + $0x60] sm:$0xff]
    %v77 = vld [vmem:[%s0 + $0x68] sm:$0xff]
    %v78 = vld [vmem:[%s0 + $0x70] sm:$0xff]
    %v79 = vld [vmem:[%s0 + $0x78] sm:$0xff]
    %v80 = vpack.c.bf16 %v65, %v64
    %v81 = vpack.c.bf16 %v67, %v66
    %v82 = vpack.c.bf16 %v69, %v68
    %v83 = vpack.c.bf16 %v71, %v70
    %v84 = vpack.c.bf16 %v73, %v72
    %v85 = vpack.c.bf16 %v75, %v74
    %v86 = vpack.c.bf16 %v77, %v76
    %v87 = vpack.c.bf16 %v79, %v78
    %89 = vset.pattern.permute.xlu0 0
    %90 = vperm.xlu0 %89, %v47
    %v91 = vpop.permute.xlu0 %90
    %94 = vset.pattern.permute.xlu0 0
    %95 = vperm.xlu0 %94, %v48
    %v96 = vpop.permute.xlu0 %95
    %99 = vset.pattern.permute.xlu0 0
    %100 = vperm.xlu0 %99, %v49
    %v101 = vpop.permute.xlu0 %100
    %104 = vset.pattern.permute.xlu0 0
    %105 = vperm.xlu0 %104, %v50
    %v106 = vpop.permute.xlu0 %105
    %109 = vset.pattern.permute.xlu0 0
    %110 = vperm.xlu0 %109, %v51
    %v111 = vpop.permute.xlu0 %110
    %114 = vset.pattern.permute.xlu0 0
    %115 = vperm.xlu0 %114, %v52
    %v116 = vpop.permute.xlu0 %115
    %119 = vset.pattern.permute.xlu0 0
    %120 = vperm.xlu0 %119, %v53
    %v121 = vpop.permute.xlu0 %120
    %124 = vset.pattern.permute.xlu0 0
    %125 = vperm.xlu0 %124, %v54
    %v126 = vpop.permute.xlu0 %125
    %v136 = vunpack.c.l.b16 %v30
    %v137 = vunpack.c.l.b16 %v31
    %v138 = vunpack.c.l.b16 %v32
    %v139 = vunpack.c.l.b16 %v33
    %v140 = vunpack.c.l.b16 %v34
    %v141 = vunpack.c.l.b16 %v35
    %v142 = vunpack.c.l.b16 %v36
    %v143 = vunpack.c.l.b16 %v37
    %v144 = vpack.c.b16 %v137, %v136
    %v145 = vpack.c.b16 %v139, %v138
    %v146 = vpack.c.b16 %v141, %v140
    %v147 = vpack.c.b16 %v143, %v142
    %vm148 = vcmask 64512
    %v150 = vsel %vm148, %v144, 0
    %v153 = vsel %vm148, %v145, 0
    %v156 = vsel %vm148, %v146, 0
    %v159 = vsel %vm148, %v147, 0
    %v162 = vsel %vm148, %v80, 0
    %v165 = vsel %vm148, %v81, 0
    %v168 = vsel %vm148, %v82, 0
    %v171 = vsel %vm148, %v83, 0
    %v174 = vsel %vm148, %v84, 0
    %v177 = vsel %vm148, %v85, 0
    %v180 = vsel %vm148, %v86, 0
    %v183 = vsel %vm148, %v87, 0
    %185 = vmatprep.subr.bf16.mxu0 0
    %186 = vmatpush1.bf16.xpose.msra.mxu0 %v162
    %187 = vmatprep.subr.bf16.mxu0 0
    %188 = vmatpush1.bf16.xpose.msra.mxu0 %v165
    %189 = vmatprep.subr.bf16.mxu0 0
    %190 = vmatpush1.bf16.xpose.msra.mxu0 %v168
    %191 = vmatprep.subr.bf16.mxu0 0
    %192 = vmatpush1.bf16.xpose.msra.mxu0 %v171
    %193 = vmatprep.subr.bf16.mxu0 0
    %194 = vmatpush1.bf16.xpose.msra.mxu0 %v174
    %195 = vmatprep.subr.bf16.mxu0 0
    %196 = vmatpush1.bf16.xpose.msra.mxu0 %v177
    %197 = vmatprep.subr.bf16.mxu0 0
    %198 = vmatpush1.bf16.xpose.msra.mxu0 %v180
    %199 = vmatprep.subr.bf16.mxu0 0
    %200 = vmatpush1.bf16.xpose.msra.mxu0 %v183
    %201 = vmatprep.subr.bf16.mxu0 0
    %202 = vmatpush1.bf16.xpose.msra.mxu0 0
    %203 = vmatprep.subr.bf16.mxu0 0
    %204 = vmatpush1.bf16.xpose.msra.mxu0 0
    %205 = vmatprep.subr.bf16.mxu0 0
    %206 = vmatpush1.bf16.xpose.msra.mxu0 0
    %207 = vmatprep.subr.bf16.mxu0 0
    %208 = vmatpush1.bf16.xpose.msra.mxu0 0
    %209 = vmatprep.subr.bf16.mxu0 0
    %210 = vmatpush1.bf16.xpose.msra.mxu0 0
    %211 = vmatprep.subr.bf16.mxu0 0
    %212 = vmatpush1.bf16.xpose.msra.mxu0 0
    %213 = vmatprep.subr.bf16.mxu0 0
    %214 = vmatpush1.bf16.xpose.msra.mxu0 0
    %215 = vmatprep.subr.bf16.mxu0 0
    %216 = vmatpush1.bf16.xpose.msra.mxu0 0
    %217 = vmatprep.mubr.bf16.mxu0 0
    %218 = vmatmul.mubr.bf16.gmra.mrb[0].mxu0 %v150
    %v219 = vpop.f32.mrb[0].mxu0
    %v220 = vadd.f32 %v91, %v219
    %v221 = vpop.f32.mrb[0].mxu0
    %v222 = vpop.f32.mrb[0].mxu0
    %v223 = vadd.f32 %v96, %v222
    %v224 = vpop.f32.mrb[0].mxu0
    %225 = vmatprep.mubr.bf16.mxu0 0
    %226 = vmatmul.mubr.bf16.gmra.mrb[0].mxu0 %v153
    %v227 = vpop.f32.mrb[0].mxu0
    %v228 = vadd.f32 %v101, %v227
    %v229 = vpop.f32.mrb[0].mxu0
    %v230 = vpop.f32.mrb[0].mxu0
    %v231 = vadd.f32 %v106, %v230
    %v232 = vpop.f32.mrb[0].mxu0
    %233 = vmatprep.mubr.bf16.mxu0 0
    %234 = vmatmul.mubr.bf16.gmra.mrb[0].mxu0 %v156
    %v235 = vpop.f32.mrb[0].mxu0
    %v236 = vadd.f32 %v111, %v235
    %v237 = vpop.f32.mrb[0].mxu0
    %v238 = vpop.f32.mrb[0].mxu0
    %v239 = vadd.f32 %v116, %v238
    %v240 = vpop.f32.mrb[0].mxu0
    %241 = vmatprep.mubr.bf16.mxu0 0
    %242 = vmatmul.mubr.bf16.gmra.mrb[0].mxu0 %v159
    %v243 = vpop.f32.mrb[0].mxu0
    %v244 = vadd.f32 %v121, %v243
    %v245 = vpop.f32.mrb[0].mxu0
    %v246 = vpop.f32.mrb[0].mxu0
    %v247 = vadd.f32 %v126, %v246
    %v248 = vpop.f32.mrb[0].mxu0
    %249 = vdwg.mxu0
    %v250 = vmax.f32 %v220, 0.0
    %v251 = vmax.f32 %v223, 0.0
    %v252 = vmax.f32 %v228, 0.0
    %v253 = vmax.f32 %v231, 0.0
    %v254 = vmax.f32 %v236, 0.0
    %v255 = vmax.f32 %v239, 0.0
    %v256 = vmax.f32 %v244, 0.0
    %v257 = vmax.f32 %v247, 0.0
    %v258 = vpack.c.bf16 %v251, %v250
    %v259 = vpack.c.bf16 %v253, %v252
    %v260 = vpack.c.bf16 %v255, %v254
    %v261 = vpack.c.bf16 %v257, %v256
    %263 = vset.pattern.permute.xlu0 0
    %264 = vperm.xlu0 %263, %v55
    %v265 = vpop.permute.xlu0 %264
    %268 = vset.pattern.permute.xlu0 0
    %269 = vperm.xlu0 %268, %v56
    %v270 = vpop.permute.xlu0 %269
    %273 = vset.pattern.permute.xlu0 0
    %274 = vperm.xlu0 %273, %v57
    %v275 = vpop.permute.xlu0 %274
    %278 = vset.pattern.permute.xlu0 0
    %279 = vperm.xlu0 %278, %v58
    %v280 = vpop.permute.xlu0 %279
    %283 = vset.pattern.permute.xlu0 0
    %284 = vperm.xlu0 %283, %v59
    %v285 = vpop.permute.xlu0 %284
    %288 = vset.pattern.permute.xlu0 0
    %289 = vperm.xlu0 %288, %v60
    %v290 = vpop.permute.xlu0 %289
    %293 = vset.pattern.permute.xlu0 0
    %294 = vperm.xlu0 %293, %v61
    %v295 = vpop.permute.xlu0 %294
    %298 = vset.pattern.permute.xlu0 0
    %299 = vperm.xlu0 %298, %v62
    %v300 = vpop.permute.xlu0 %299
    %v310 = vunpack.c.l.b16 %v38
    %v311 = vunpack.c.l.b16 %v39
    %v312 = vunpack.c.l.b16 %v40
    %v313 = vunpack.c.l.b16 %v41
    %v314 = vunpack.c.l.b16 %v42
    %v315 = vunpack.c.l.b16 %v43
    %v316 = vunpack.c.l.b16 %v44
    %v317 = vunpack.c.l.b16 %v45
    %v318 = vpack.c.b16 %v311, %v310
    %v319 = vpack.c.b16 %v313, %v312
    %v320 = vpack.c.b16 %v315, %v314
    %v321 = vpack.c.b16 %v317, %v316
    %vm322 = vcmask 523264
    %v324 = vsel %vm322, %v318, 0
    %v327 = vsel %vm322, %v319, 0
    %v330 = vsel %vm322, %v320, 0
    %v333 = vsel %vm322, %v321, 0
    %335 = vmatprep.subr.bf16.mxu0 0
    %336 = vmatpush1.bf16.msra.mxu0 %v258
    %337 = vmatprep.subr.bf16.mxu0 0
    %338 = vmatpush1.bf16.msra.mxu0 %v259
    %339 = vmatprep.subr.bf16.mxu0 0
    %340 = vmatpush1.bf16.msra.mxu0 %v260
    %341 = vmatprep.subr.bf16.mxu0 0
    %342 = vmatpush1.bf16.msra.mxu0 %v261
    %343 = vmatprep.subr.bf16.mxu0 0
    %344 = vmatpush1.bf16.msra.mxu0 0
    %345 = vmatprep.subr.bf16.mxu0 0
    %346 = vmatpush1.bf16.msra.mxu0 0
    %347 = vmatprep.subr.bf16.mxu0 0
    %348 = vmatpush1.bf16.msra.mxu0 0
    %349 = vmatprep.subr.bf16.mxu0 0
    %350 = vmatpush1.bf16.msra.mxu0 0
    %351 = vmatprep.subr.bf16.mxu0 0
    %352 = vmatpush1.bf16.msra.mxu0 0
    %353 = vmatprep.subr.bf16.mxu0 0
    %354 = vmatpush1.bf16.msra.mxu0 0
    %355 = vmatprep.subr.bf16.mxu0 0
    %356 = vmatpush1.bf16.msra.mxu0 0
    %357 = vmatprep.subr.bf16.mxu0 0
    %358 = vmatpush1.bf16.msra.mxu0 0
    %359 = vmatprep.subr.bf16.mxu0 0
    %360 = vmatpush1.bf16.msra.mxu0 0
    %361 = vmatprep.subr.bf16.mxu0 0
    %362 = vmatpush1.bf16.msra.mxu0 0
    %363 = vmatprep.subr.bf16.mxu0 0
    %364 = vmatpush1.bf16.msra.mxu0 0
    %365 = vmatprep.subr.bf16.mxu0 0
    %366 = vmatpush1.bf16.msra.mxu0 0
    %367 = vmatprep.mubr.bf16.mxu0 0
    %368 = vmatmul.mubr.bf16.gmra.mrb[0].mxu0 %v324
    %v369 = vpop.f32.mrb[0].mxu0
    %v370 = vadd.f32 %v265, %v369
    %v371 = vpop.f32.mrb[0].mxu0
    %v372 = vpop.f32.mrb[0].mxu0
    %v373 = vadd.f32 %v270, %v372
    %v374 = vpop.f32.mrb[0].mxu0
    %375 = vmatprep.mubr.bf16.mxu0 0
    %376 = vmatmul.mubr.bf16.gmra.mrb[0].mxu0 %v327
    %v377 = vpop.f32.mrb[0].mxu0
    %v378 = vadd.f32 %v275, %v377
    %v379 = vpop.f32.mrb[0].mxu0
    %v380 = vpop.f32.mrb[0].mxu0
    %v381 = vadd.f32 %v280, %v380
    %v382 = vpop.f32.mrb[0].mxu0
    %383 = vmatprep.mubr.bf16.mxu0 0
    %384 = vmatmul.mubr.bf16.gmra.mrb[0].mxu0 %v330
    %v385 = vpop.f32.mrb[0].mxu0
    %v386 = vadd.f32 %v285, %v385
    %v387 = vpop.f32.mrb[0].mxu0
    %v388 = vpop.f32.mrb[0].mxu0
    %v389 = vadd.f32 %v290, %v388
    %v390 = vpop.f32.mrb[0].mxu0
    %391 = vmatprep.mubr.bf16.mxu0 0
    %392 = vmatmul.mubr.bf16.gmra.mrb[0].mxu0 %v333
    %v393 = vpop.f32.mrb[0].mxu0
    %v394 = vadd.f32 %v295, %v393
    %v395 = vpop.f32.mrb[0].mxu0
    %v396 = vpop.f32.mrb[0].mxu0
    %v397 = vadd.f32 %v300, %v396
    %v398 = vpop.f32.mrb[0].mxu0
    %399 = vdwg.mxu0
    %v400 = vmax.f32 %v370, 0.0
    %v401 = vmax.f32 %v373, 0.0
    %v402 = vmax.f32 %v378, 0.0
    %v403 = vmax.f32 %v381, 0.0
    %v404 = vmax.f32 %v386, 0.0
    %v405 = vmax.f32 %v389, 0.0
    %v406 = vmax.f32 %v394, 0.0
    %v407 = vmax.f32 %v397, 0.0
    %v408 = vpack.c.bf16 %v401, %v400
    %v409 = vpack.c.bf16 %v403, %v402
    %v410 = vpack.c.bf16 %v405, %v404
    %v411 = vpack.c.bf16 %v407, %v406
    %413 = vset.pattern.permute.xlu0 0
    %414 = vperm.xlu0 %413, %v63
    %v415 = vpop.permute.xlu0 %414
    %v417 = vlaneseq
    %v418 = vshrl.u32 %v417, 7
    %v419 = vsub.s32 0, %v418
    %v420 = vrot.slane %v415, %v419
    %v422 = vsel %vm322, %v46, 0
    %424 = vmatprep.subr.bf16.mxu0 0
    %425 = vmatpush1.bf16.msra.mxu0 %v408
    %426 = vmatprep.subr.bf16.mxu0 0
    %427 = vmatpush1.bf16.msra.mxu0 %v409
    %428 = vmatprep.subr.bf16.mxu0 0
    %429 = vmatpush1.bf16.msra.mxu0 %v410
    %430 = vmatprep.subr.bf16.mxu0 0
    %431 = vmatpush1.bf16.msra.mxu0 %v411
    %432 = vmatprep.subr.bf16.mxu0 0
    %433 = vmatpush1.bf16.msra.mxu0 0
    %434 = vmatprep.subr.bf16.mxu0 0
    %435 = vmatpush1.bf16.msra.mxu0 0
    %436 = vmatprep.subr.bf16.mxu0 0
    %437 = vmatpush1.bf16.msra.mxu0 0
    %438 = vmatprep.subr.bf16.mxu0 0
    %439 = vmatpush1.bf16.msra.mxu0 0
    %440 = vmatprep.subr.bf16.mxu0 0
    %441 = vmatpush1.bf16.msra.mxu0 0
    %442 = vmatprep.subr.bf16.mxu0 0
    %443 = vmatpush1.bf16.msra.mxu0 0
    %444 = vmatprep.subr.bf16.mxu0 0
    %445 = vmatpush1.bf16.msra.mxu0 0
    %446 = vmatprep.subr.bf16.mxu0 0
    %447 = vmatpush1.bf16.msra.mxu0 0
    %448 = vmatprep.subr.bf16.mxu0 0
    %449 = vmatpush1.bf16.msra.mxu0 0
    %450 = vmatprep.subr.bf16.mxu0 0
    %451 = vmatpush1.bf16.msra.mxu0 0
    %452 = vmatprep.subr.bf16.mxu0 0
    %453 = vmatpush1.bf16.msra.mxu0 0
    %454 = vmatprep.subr.bf16.mxu0 0
    %455 = vmatpush1.bf16.msra.mxu0 0
    %456 = vmatprep.mubr.bf16.mxu0 0
    %457 = vmatmul.mubr.bf16.gmra.mrb[0].mxu0 %v422
    %v458 = vpop.f32.mrb[0].mxu0
    %v459 = vadd.f32 %v420, %v458
    %v460 = vpop.f32.mrb[0].mxu0
    %v461 = vpop.f32.mrb[0].mxu0
    %v462 = vpop.f32.mrb[0].mxu0
    %463 = vdwg.mxu0
    %v464 = vmax.f32 %v459, 0.0
    %465 = vst [vmem:[#allocation3] sm:$0x1] %v464
    // Predicated region
    $region30: #{tpu_custom_call.1} parent=1 // pred_check
      _
    $region31: #{tpu_custom_call.1} parent=1 // pred_check_branch
      %467 = sbr.rel (0) target = $region33
    $region32: #{tpu_custom_call.1} parent=1 // pred_region
      %s469 = ssub.s32 16, 16
      %470 = vsyncadd [#allocation4], %s469
      %s472 = sshll.u32 [#allocation3], 4
      %s473 = int_to_ptr.vmem [resolvable:$true] %s472
      %475 = dma.vmem_to_hbm [thread:$0]  %s473, 16, %s7, [#allocation4]
    $region33: #{tpu_custom_call.1} parent=1 // pred_fallthru
      _
    // Predicated region
    $region34: #{tpu_custom_call.1} parent=1 // pred_check
      _
    $region35: #{tpu_custom_call.1} parent=1 // pred_check_branch
      %477 = sbr.rel (0) target = $region37
    $region36: #{tpu_custom_call.1} parent=1 // pred_region
      %478 = dma.done [#allocation4], 16
    $region37: #{tpu_custom_call.1} parent=1 // pred_fallthru
      _
    %479 = vsyncpa [#allocation4], 1

</llo_original>
